<compile_context>
chip_gen: v5e
topology: v5e:2x2
jax: 0.10.0
libtpu: 0.0.40
codegen_flags: <defaults>
</compile_context>

<pallas_src>
import functools

import jax
import jax.numpy as jnp
from jax.experimental import pallas as pl
from jax.experimental.pallas import tpu as pltpu


# streamed intermediate activations (z / y); stats, norm math, final output stay f32
STREAM_DTYPE = jnp.bfloat16
# explicit scoped-VMEM budget: above v5e's 16 MiB default, within every generation's
# physical VMEM, with headroom on v7x (64 MiB / TC)
VMEM_LIMIT_BYTES = 32 * 1024 * 1024
LEAKY_SLOPE = 0.1
IN_EPS = 1e-5


# ----------------------------------------------------------------------------
# helpers
# ----------------------------------------------------------------------------
def _round_up(n, m):
    return (n + m - 1) // m * m


def _row_tile(n, tm_max):
    """Row tile: multiple of 16 (bf16 sublane packing), capped at tm_max.
    Grids are ragged (pl.cdiv); no padding of the arrays themselves."""
    tm_max = max(16, (tm_max // 16) * 16)
    return min(tm_max, _round_up(n, 16))


def _compiler_params():
    return pltpu.CompilerParams(
        dimension_semantics=("parallel",),
        vmem_limit_bytes=VMEM_LIMIT_BYTES,
    )


def shadow_gather(x, up_inds):
    """closest_pool: row index == x.shape[0] selects the zero 'shadow' row.
    clamp + mask avoids copying the whole coarse array to append a zero row."""
    idx = up_inds[:, 0]
    n = x.shape[0]
    gathered = jnp.take(x, jnp.minimum(idx, n - 1), axis=0)
    return jnp.where((idx < n)[:, None], gathered, 0)


def finalize_stats(part, n, eps=IN_EPS):
    """Reduce per-tile (sum, sumsq) partials to (mean, inv_std); tiny (2, C) op."""
    tot = jnp.sum(part, axis=0)                         # (2, C)
    mean = tot[0] / n
    var = jnp.maximum(tot[1] / n - mean * mean, 0.0)    # clamp: E[y^2]-E[y]^2 in f32
    inv_std = jax.lax.rsqrt(var + eps)
    return jnp.stack([mean, inv_std])                   # (2, C) f32


# ----------------------------------------------------------------------------
# Pallas kernels
# ----------------------------------------------------------------------------
def _linear_kernel(x_ref, w_ref, o_ref):
    """o = x @ W (row tile)."""
    o_ref[...] = jnp.dot(
        x_ref[...], w_ref[...], preferred_element_type=jnp.float32
    ).astype(o_ref.dtype)


def _add_linear_kernel(z_ref, s_ref, w_ref, o_ref):
    """o = z + s @ W (row tile).  Replaces concat([x_up, skip]) @ W for last_unary."""
    o_ref[...] = (
        z_ref[...].astype(jnp.float32)
        + jnp.dot(s_ref[...], w_ref[...], preferred_element_type=jnp.float32)
    ).astype(o_ref.dtype)


def _unary_stats_tail(y, y_ref, part_ref, tile_start, n_rows):
    """Store y (bf16 stream) and per-tile masked (sum, sumsq) partials."""
    y_ref[...] = y.astype(y_ref.dtype)
    # mask ragged tail rows (and any stale-VMEM garbage there) out of the stats
    row = jax.lax.broadcasted_iota(jnp.int32, y.shape, 0) + tile_start
    ym = jnp.where(row < n_rows, y, 0.0)
    part_ref[0:1, :] = jnp.sum(ym, axis=0, keepdims=True)
    part_ref[1:2, :] = jnp.sum(ym * ym, axis=0, keepdims=True)


def _unary_matmul_stats_kernel(z_ref, s_ref, w_ref, y_ref, part_ref, *, n_rows, tm):
    """Unary pass A with fused skip-concat: y = z + s @ W, plus per-tile partials."""
    y = z_ref[...].astype(jnp.float32) + jnp.dot(
        s_ref[...], w_ref[...], preferred_element_type=jnp.float32
    )
    _unary_stats_tail(y, y_ref, part_ref, pl.program_id(0) * tm, n_rows)


def _unary_matmul_stats_noadd_kernel(s_ref, w_ref, y_ref, part_ref, *, n_rows, tm):
    """Unary pass A without an additive term (no-concat fallback; avoids a zero z)."""
    y = jnp.dot(s_ref[...], w_ref[...], preferred_element_type=jnp.float32)
    _unary_stats_tail(y, y_ref, part_ref, pl.program_id(0) * tm, n_rows)


def _norm_act_linear_kernel(y_ref, stats_ref, w_ref, o_ref, *, slope):
    """Deferred unary pass B fused into the consumer matmul:
    o = leaky_relu((y - mean) * inv_std) @ W, all on the fly."""
    stats = stats_ref[...]
    yn = (y_ref[...].astype(jnp.float32) - stats[0:1, :]) * stats[1:2, :]
    a = jnp.where(yn >= 0.0, yn, slope * yn)
    o_ref[...] = jnp.dot(
        a, w_ref[...], preferred_element_type=jnp.float32
    ).astype(o_ref.dtype)


def _norm_act_kernel(y_ref, stats_ref, o_ref, *, slope):
    """Standalone normalize + LeakyReLU (only used when the unary output cannot be
    fused into a following matmul, e.g. if unary were the final decoder block)."""
    stats = stats_ref[...]
    yn = (y_ref[...].astype(jnp.float32) - stats[0:1, :]) * stats[1:2, :]
    o_ref[...] = jnp.where(yn >= 0.0, yn, slope * yn).astype(o_ref.dtype)


# ----------------------------------------------------------------------------
# Pallas wrappers (ragged row-tiled grids, "parallel" semantics)
# ----------------------------------------------------------------------------
def linear_rows(x, w, *, out_dtype=jnp.float32, tm_max=2048):
    """y = x @ W, row-tiled."""
    n, cin = x.shape
    cout = w.shape[1]
    tm = _row_tile(n, tm_max)
    return pl.pallas_call(
        _linear_kernel,
        out_shape=jax.ShapeDtypeStruct((n, cout), out_dtype),
        grid=(pl.cdiv(n, tm),),
        in_specs=[
            pl.BlockSpec((tm, cin), lambda i: (i, 0)),
            pl.BlockSpec((cin, cout), lambda i: (0, 0)),
        ],
        out_specs=pl.BlockSpec((tm, cout), lambda i: (i, 0)),
        compiler_params=_compiler_params(),
    )(x, w)


def fused_linear(z, s, w, *, out_dtype=jnp.float32, tm_max=2048):
    """y = z + s @ W, row-tiled (LastUnaryBlock with fused skip-concat)."""
    n, cout = z.shape
    cs = s.shape[1]
    tm = _row_tile(n, tm_max)
    return pl.pallas_call(
        _add_linear_kernel,
        out_shape=jax.ShapeDtypeStruct((n, cout), out_dtype),
        grid=(pl.cdiv(n, tm),),
        in_specs=[
            pl.BlockSpec((tm, cout), lambda i: (i, 0)),
            pl.BlockSpec((tm, cs), lambda i: (i, 0)),
            pl.BlockSpec((cs, cout), lambda i: (0, 0)),
        ],
        out_specs=pl.BlockSpec((tm, cout), lambda i: (i, 0)),
        compiler_params=_compiler_params(),
    )(z, s, w)


def unary_matmul_stats(z, s, w, *, tm_max=2048):
    """UnaryBlock pass A: y = (z +) s @ W plus per-tile (sum, sumsq) partials.
    Returns (y[bf16], partials[(num_tiles, 2, C) f32]); normalization is deferred."""
    n, cs = s.shape
    cout = w.shape[1]
    tm = _row_tile(n, tm_max)
    nt = pl.cdiv(n, tm)
    common = dict(
        out_shape=(
            jax.ShapeDtypeStruct((n, cout), STREAM_DTYPE),
            jax.ShapeDtypeStruct((nt, 2, cout), jnp.float32),
        ),
        grid=(nt,),
        out_specs=(
            pl.BlockSpec((tm, cout), lambda i: (i, 0)),
            pl.BlockSpec((None, 2, cout), lambda i: (i, 0, 0)),
        ),
        compiler_params=_compiler_params(),
    )
    if z is None:
        y, part = pl.pallas_call(
            functools.partial(_unary_matmul_stats_noadd_kernel, n_rows=n, tm=tm),
            in_specs=[
                pl.BlockSpec((tm, cs), lambda i: (i, 0)),
                pl.BlockSpec((cs, cout), lambda i: (0, 0)),
            ],
            **common,
        )(s, w)
    else:
        y, part = pl.pallas_call(
            functools.partial(_unary_matmul_stats_kernel, n_rows=n, tm=tm),
            in_specs=[
                pl.BlockSpec((tm, cout), lambda i: (i, 0)),
                pl.BlockSpec((tm, cs), lambda i: (i, 0)),
                pl.BlockSpec((cs, cout), lambda i: (0, 0)),
            ],
            **common,
        )(z, s, w)
    return y, part


def norm_act_linear_rows(y, stats, w, *, slope=LEAKY_SLOPE,
                         out_dtype=jnp.float32, tm_max=2048):
    """Deferred pass B fused into the consumer matmul: leaky((y-m)*istd) @ W."""
    n, c = y.shape
    cout = w.shape[1]
    tm = _row_tile(n, tm_max)
    return pl.pallas_call(
        functools.partial(_norm_act_linear_kernel, slope=slope),
        out_shape=jax.ShapeDtypeStruct((n, cout), out_dtype),
        grid=(pl.cdiv(n, tm),),
        in_specs=[
            pl.BlockSpec((tm, c), lambda i: (i, 0)),
            pl.BlockSpec((2, c), lambda i: (0, 0)),
            pl.BlockSpec((c, cout), lambda i: (0, 0)),
        ],
        out_specs=pl.BlockSpec((tm, cout), lambda i: (i, 0)),
        compiler_params=_compiler_params(),
    )(y, stats, w)


def norm_act(y, stats, *, slope=LEAKY_SLOPE, out_dtype=jnp.float32, tm_max=2048):
    """Standalone deferred pass B (only needed when fusion into a matmul is impossible)."""
    n, c = y.shape
    tm = _row_tile(n, tm_max)
    return pl.pallas_call(
        functools.partial(_norm_act_kernel, slope=slope),
        out_shape=jax.ShapeDtypeStruct((n, c), out_dtype),
        grid=(pl.cdiv(n, tm),),
        in_specs=[
            pl.BlockSpec((tm, c), lambda i: (i, 0)),
            pl.BlockSpec((2, c), lambda i: (0, 0)),
        ],
        out_specs=pl.BlockSpec((tm, c), lambda i: (i, 0)),
        compiler_params=_compiler_params(),
    )(y, stats)


# ----------------------------------------------------------------------------
# Decoder module (mirrors KpconvDecoder.__init__ bookkeeping)
# ----------------------------------------------------------------------------
class Config:
    first_subsampling_dl = 0.03
    conv_radius = 2.5
    kpconv_in_dim = 4
    first_features_dim = 32
    num_kernel_points = 15
    final_feats_dim = 32
    use_batch_norm = True
    batch_norm_momentum = 0.02
    kpconv_architecture = [
        "simple",
        "resnetb",
        "resnetb_strided",
        "resnetb",
        "resnetb_strided",
        "resnetb",
        "nearest_upsample",
        "unary",
        "nearest_upsample",
        "last_unary",
    ]


class KpconvDecoderPallas:
    def __init__(self, config, key, tm_max=2048):
        self.tm_max = tm_max
        layer = 0
        r = config.first_subsampling_dl * config.conv_radius
        in_dim = config.kpconv_in_dim
        out_dim = config.first_features_dim
        self.K = config.num_kernel_points
        self.decoder_concats = []
        decoder_skip_dims = []
        start_i = 0
        arch = config.kpconv_architecture

        # --- encoder bookkeeping (same arithmetic as the PyTorch __init__) ---
        for block_i, block in enumerate(arch):
            if "upsample" in block:
                start_i = block_i
                break
            if any(t in block for t in ["pool", "strided", "upsample", "global"]):
                decoder_skip_dims.append(in_dim)
            if "simple" in block:
                in_dim = out_dim // 2
            else:
                in_dim = out_dim
            if "pool" in block or "strided" in block:
                layer += 1
                r *= 2
                out_dim *= 2

        self.in_feat_dim = in_dim  # channel count of decoder input x
        self.skip_dims = list(decoder_skip_dims)

        # --- build decoder blocks ---
        self.blocks = []  # list of (kind, payload)
        for block_i, block in enumerate(arch[start_i:]):
            if block_i > 0 and "upsample" in arch[start_i + block_i - 1]:
                in_dim += decoder_skip_dims[layer]
                self.decoder_concats.append(block_i)

            if "upsample" in block:
                self.blocks.append(("nearest_upsample", layer))
            elif block == "unary":
                key, sub = jax.random.split(key)
                w = jax.random.normal(sub, (in_dim, out_dim), jnp.float32)
                w = w / jnp.sqrt(jnp.float32(in_dim))
                self.blocks.append(("unary", w))
            elif block == "last_unary":
                key, sub = jax.random.split(key)
                w = jax.random.normal(sub, (in_dim, config.final_feats_dim), jnp.float32)
                w = w / jnp.sqrt(jnp.float32(in_dim))
                self.blocks.append(("last_unary", w))
            else:
                # TODO(synk): other decoder block types (e.g. resnetb in decoder) not in this config
                raise NotImplementedError(block)

            in_dim = out_dim
            if "upsample" in block:
                layer -= 1
                r *= 0.5
                out_dim = out_dim // 2

    def __call__(self, x, skip_x, batch):
        skip_x = list(skip_x)   # torch code pops from this list
        pending_up = None       # deferred nearest-upsample indices
        stats = None            # deferred InstanceNorm+LeakyReLU stats for x

        def materialize(x, stats):
            if stats is None:
                return x
            return norm_act(x, stats, tm_max=self.tm_max)

        for block_i, (kind, payload) in enumerate(self.blocks):
            concat_here = block_i in self.decoder_concats

            if kind == "nearest_upsample":
                if pending_up is not None:                 # two upsamples in a row
                    x = materialize(x, stats); stats = None
                    x = shadow_gather(x, pending_up)
                if concat_here:                            # concat before an upsample
                    x = materialize(x, stats); stats = None
                    x = jnp.concatenate([x, skip_x.pop()], axis=1)
                pending_up = batch["upsamples"][payload - 1]
                continue

            w = payload
            if concat_here:
                skip = skip_x.pop()
                c_x = x.shape[1]
                w_x, w_s = w[:c_x], w[c_x:]
                # x-part of the linear at the COARSE resolution (gather commutes with
                # a row-wise matmul; shadow rows stay exactly zero).  A deferred
                # InstanceNorm+LeakyReLU from the previous unary block is applied on
                # the fly inside this matmul -- no extra sweep over HBM.
                if stats is not None:
                    z = norm_act_linear_rows(x, stats, w_x,
                                             out_dtype=STREAM_DTYPE,
                                             tm_max=self.tm_max)
                    stats = None
                else:
                    z = linear_rows(x, w_x, out_dtype=STREAM_DTYPE,
                                    tm_max=self.tm_max)
                if pending_up is not None:
                    # TODO(synk): fuse this gather into the next kernel (scalar-prefetch
                    # indices + in-kernel row gather of the VMEM-resident coarse z).
                    z = shadow_gather(z, pending_up)
                    pending_up = None
                if kind == "unary":
                    x, part = unary_matmul_stats(z, skip, w_s, tm_max=self.tm_max)
                    stats = finalize_stats(part, z.shape[0])   # norm deferred to consumer
                else:  # last_unary
                    x = fused_linear(z, skip, w_s, out_dtype=jnp.float32,
                                     tm_max=self.tm_max)
            else:
                if pending_up is not None:
                    x = materialize(x, stats); stats = None
                    x = shadow_gather(x, pending_up)
                    pending_up = None
                if kind == "unary":
                    x = materialize(x, stats); stats = None
                    n_rows = x.shape[0]
                    x, part = unary_matmul_stats(None, x, w, tm_max=self.tm_max)
                    stats = finalize_stats(part, n_rows)
                else:  # last_unary without concat
                    x = materialize(x, stats); stats = None
                    x = linear_rows(x, w, out_dtype=jnp.float32, tm_max=self.tm_max)

        if stats is not None:
            x = norm_act(x, stats, tm_max=self.tm_max)
        if pending_up is not None:
            x = shadow_gather(x, pending_up)
        return x


# ----------------------------------------------------------------------------
# Pure-JAX reference (faithful torch semantics: concat + single f32 matmul)
# ----------------------------------------------------------------------------
def reference_forward(decoder, x, skip_x, batch):
    skip_x = list(skip_x)
    for block_i, (kind, payload) in enumerate(decoder.blocks):
        if block_i in decoder.decoder_concats:
            x = jnp.concatenate([x, skip_x.pop()], axis=1)
        if kind == "nearest_upsample":
            xp = jnp.concatenate([x, jnp.zeros_like(x[:1])], axis=0)
            x = xp[batch["upsamples"][payload - 1][:, 0]]
        elif kind == "unary":
            y = jnp.dot(x, payload, precision=jax.lax.Precision.HIGHEST)
            m = jnp.mean(y, axis=0, keepdims=True)
            v = jnp.mean(jnp.square(y - m), axis=0, keepdims=True)
            y = (y - m) / jnp.sqrt(v + IN_EPS)
            x = jnp.where(y >= 0.0, y, LEAKY_SLOPE * y)
        else:
            x = jnp.dot(x, payload, precision=jax.lax.Precision.HIGHEST)
    return x


# ----------------------------------------------------------------------------
if __name__ == "__main__":
    cfg = Config()
    key = jax.random.PRNGKey(0)
    k_model, k_x, k_s0, k_s1, k_u0, k_u1 = jax.random.split(key, 6)

    # point counts per pyramid level (fine -> coarse); deliberately NOT multiples of
    # the row tile so the ragged-grid + masked-stats paths are exercised.
    N0, N1, N2 = 200, 90, 40

    # small tm_max so the toy shapes still produce multi-step grids
    decoder = KpconvDecoderPallas(cfg, k_model, tm_max=32)
    # decoder input: coarsest-level features, channels = 128 for this config
    x = jax.random.normal(k_x, (N2, decoder.in_feat_dim), jnp.float32)
    # encoder skip features (appended in encoder order: layer0 first, layer1 second)
    skip0 = jax.random.normal(k_s0, (N0, decoder.skip_dims[0]), jnp.float32)  # (200, 32)
    skip1 = jax.random.normal(k_s1, (N1, decoder.skip_dims[1]), jnp.float32)  # (90, 64)
    skip_x = [skip0, skip1]
    # upsample neighbour indices (column 0 = nearest neighbour; value == src_N means shadow)
    up0 = jax.random.randint(k_u0, (N0, 1), 0, N1 + 1)  # fine level <- layer1
    up1 = jax.random.randint(k_u1, (N1, 1), 0, N2 + 1)  # layer1     <- layer2
    batch = {"upsamples": [up0, up1]}

    out = jax.block_until_ready(decoder(x, skip_x, batch))

    ref = reference_forward(decoder, x, skip_x, batch)
    assert out.shape == (N0, cfg.final_feats_dim), out.shape
    # tolerance absorbs default (bf16) MXU precision + bf16 activation streaming
    # vs the f32 / HIGHEST-precision reference
    max_err = float(jnp.max(jnp.abs(out - ref)))
    assert jnp.allclose(out, ref, atol=3e-2, rtol=3e-2), max_err
    print("KERNEL_OK")
</pallas_src>

<mosaic_0001>
module attributes {stable_mosaic.version = 11 : i64} {
  func.func @_linear_kernel(%arg0: i32, %arg1: memref<32x128xf32, #tpu.memory_space<vmem>>, %arg2: memref<128x64xf32, #tpu.memory_space<vmem>>, %arg3: memref<32x64xbf16, #tpu.memory_space<vmem>>) attributes {dimension_semantics = [#tpu.dimension_semantics<parallel>], iteration_bounds = array<i64: 2>, scalar_prefetch = 0 : i64, scratch_operands = 0 : i64, tpu.core_type = #tpu.core_type<tc>, window_params = [{transform_indices = @transform_0, window_bounds = array<i64: 32, 128>}, {pipeline_mode = #tpu.pipeline_mode<synchronous>, transform_indices = @transform_1, window_bounds = array<i64: 128, 64>}, {transform_indices = @transform_2, window_bounds = array<i64: 32, 64>}]} {
    %c0 = arith.constant 0 : index
    %c0_0 = arith.constant 0 : index
    %0 = vector.load %arg1[%c0, %c0_0] : memref<32x128xf32, #tpu.memory_space<vmem>>, vector<32x128xf32>
    %c0_1 = arith.constant 0 : index
    %c0_2 = arith.constant 0 : index
    %1 = vector.load %arg2[%c0_1, %c0_2] : memref<128x64xf32, #tpu.memory_space<vmem>>, vector<128x64xf32>
    %cst = arith.constant dense<0.000000e+00> : vector<32x64xf32>
    %2 = tpu.matmul %0, %1, %cst {dimension_numbers = #tpu.dot_dimension_numbers<[1], [0], [0], [1], [0, 0, 1, 1], [], []>} : vector<32x128xf32>, vector<128x64xf32>, vector<32x64xf32> -> vector<32x64xf32>
    %3 = arith.truncf %2 : vector<32x64xf32> to vector<32x64xbf16>
    %c0_3 = arith.constant 0 : index
    %c0_4 = arith.constant 0 : index
    %4 = vector.load %arg3[%c0_3, %c0_4] : memref<32x64xbf16, #tpu.memory_space<vmem>>, vector<32x64xbf16>
    tpu.vector_store %arg3[%c0_3, %c0_4], %3 {strides = array<i32>} : memref<32x64xbf16, #tpu.memory_space<vmem>>, vector<32x64xbf16>,
    return
  }
  func.func @transform_0(%arg0: i32) -> (i32, i32) {
    %c0_i32 = arith.constant 0 : i32
    %c0_i32_0 = arith.constant 0 : i32
    return %arg0, %c0_i32 : i32, i32
  }
  func.func @transform_1(%arg0: i32) -> (i32, i32) {
    %c0_i32 = arith.constant 0 : i32
    %c0_i32_0 = arith.constant 0 : i32
    %c0_i32_1 = arith.constant 0 : i32
    return %c0_i32, %c0_i32_0 : i32, i32
  }
  func.func @transform_2(%arg0: i32) -> (i32, i32) {
    %c0_i32 = arith.constant 0 : i32
    %c0_i32_0 = arith.constant 0 : i32
    return %arg0, %c0_i32 : i32, i32
  }
}

</mosaic_0001>

<llo_original>
// kernel: tpu_custom_call.1
$region0: #{tpu_custom_call.1}
  #allocation0 [shape = 'u32[]', space=smem, size = 0x4, offset = 0x4, fixed_abs, tag = 'smem constant byte address 0x4 - core index']
  #allocation1 [shape = 'u32[72,128]{1,0:T(1,128)}', space=vmem, size = 0x9000, scoped, tag = 'internal scratch']
  %s0 = inlined_call_operand.vmem [shape: f32[40,128], index: 0, kind: input, shape index: {}]
  %s1 = inlined_call_operand.vmem [shape: f32[128,64], index: 1, kind: input, shape index: {}]
  %s2 = inlined_call_operand.hbm [shape: bf16[40,64], index: 2, kind: output, shape index: {}]
  %s3 = sld [smem:[#allocation0]]
  $region41: #{tpu_custom_call.1} parent=0
    _
  %s5 = ssub.s32 1, %s3
  %s6 = scalar_select 0, %s5, %s3
  $region1: #{tpu_custom_call.1} parent=0
    #allocation2 [shape = 'u8[16384]{0}', space=vmem, size = 0x4000, scoped, tag = 'output window, operand 0']
    #allocation3 [shape = 's32[2]{0}', space=sflag, size = 0x8, scoped, tag = 'scoped memory for tpu_custom_call.1']
    %7 = vsyncpa [#allocation3], 0
    %s8 = scalar_lea.sflag [#allocation3], 1
    %9 = vsyncpa %s8, 0
    loop: start=0, step=1, limit=4
    $region2: #{tpu_custom_call.1} parent=1 // loop_pre_header
      _
    $region3: #{tpu_custom_call.1} parent=1 // loop_header
      %s11 = sphi 0, %s15
      %p12 = scmp.ge.s32.totalorder %s11, 4
      %s21 = sphi 0, %s23
      %s24 = sphi 0, %s21
      %s25 = sphi 0, %s24
      %s41 = sphi 0, %s25
      %s45 = sphi 0, %s45
      %s47 = sphi 0, %s45
      %s48 = sphi 0, %s47
      %s62 = sphi 0, %s48
      %s68 = sphi 0, %s70
      %s71 = sphi 0, %s68
      %s72 = sphi 0, %s71
      %s88 = sphi 0, %s72
    $region4: #{tpu_custom_call.1} parent=1 // loop_header_branch
      %14 = sbr.rel (%p12) target = $region8
    $region5: #{tpu_custom_call.1} parent=1 // loop_body
      %s16 = ssub.s32 %s11, 1
      %s17 = ssub.s32 %s11, 2
      %s18 = sadd.s32 %s11, 1
      %s19 = ssub.s32 %s11, %s18
      %p20 = scmp.eq.s32.totalorder %s19, 0
      %s22 = sadd.s32 %s21, 1
      %s23 = scalar_select %p20, %s21, %s22
      %p26 = pneg %p20
      %p27 = scmp.eq.s32.totalorder %s11, 1
      %p28 = por %p26, %p27
      %p29 = scmp.ne.s32.totalorder %s21, %s24
      %p30 = scmp.eq.s32.totalorder %s11, 0
      %p31 = por %p29, %p30
      %p32 = scmp.ne.s32.totalorder %s21, %s24
      %p33 = scmp.eq.s32.totalorder %s16, 1
      %p34 = por %p32, %p33
      %p35 = scmp.ne.s32.totalorder %s24, %s25
      %p36 = scmp.eq.s32.totalorder %s16, 0
      %p37 = por %p35, %p36
      %p38 = scmp.ne.s32.totalorder %s24, %s25
      %p39 = scmp.eq.s32.totalorder %s17, 1
      %p40 = por %p38, %p39
      %p42 = scmp.ne.s32.totalorder %s25, %s41
      %p43 = scmp.eq.s32.totalorder %s17, 0
      %p44 = por %p42, %p43
      %s46 = sadd.s32 %s45, 1
      %p49 = scmp.eq.s32.totalorder %s11, 1
      %p50 = scmp.ne.s32.totalorder %s45, %s47
      %p51 = scmp.eq.s32.totalorder %s11, 0
      %p52 = por %p50, %p51
      %p53 = scmp.ne.s32.totalorder %s45, %s47
      %p54 = scmp.eq.s32.totalorder %s16, 1
      %p55 = por %p53, %p54
      %p56 = scmp.ne.s32.totalorder %s47, %s48
      %p57 = scmp.eq.s32.totalorder %s16, 0
      %p58 = por %p56, %p57
      %p59 = scmp.ne.s32.totalorder %s47, %s48
      %p60 = scmp.eq.s32.totalorder %s17, 1
      %p61 = por %p59, %p60
      %p63 = scmp.ne.s32.totalorder %s48, %s62
      %p64 = scmp.eq.s32.totalorder %s17, 0
      %p65 = por %p63, %p64
      %s66 = ssub.s32 %s11, %s18
      %p67 = scmp.eq.s32.totalorder %s66, 0
      %s69 = sadd.s32 %s68, 1
      %s70 = scalar_select %p67, %s68, %s69
      %p73 = pneg %p67
      %p74 = scmp.eq.s32.totalorder %s11, 1
      %p75 = por %p73, %p74
      %p76 = scmp.ne.s32.totalorder %s68, %s71
      %p77 = scmp.eq.s32.totalorder %s11, 0
      %p78 = por %p76, %p77
      %p79 = scmp.ne.s32.totalorder %s68, %s71
      %p80 = scmp.eq.s32.totalorder %s16, 1
      %p81 = por %p79, %p80
      %p82 = scmp.ne.s32.totalorder %s71, %s72
      %p83 = scmp.eq.s32.totalorder %s16, 0
      %p84 = por %p82, %p83
      %p85 = scmp.ne.s32.totalorder %s71, %s72
      %p86 = scmp.eq.s32.totalorder %s17, 1
      %p87 = por %p85, %p86
      %p89 = scmp.ne.s32.totalorder %s72, %s88
      %p90 = scmp.eq.s32.totalorder %s17, 0
      %p91 = por %p89, %p90
      %p92 = scmp.le.s32.totalorder 1, %s11
      %p93 = scmp.lt.s32.totalorder %s11, 3
      %p94 = pnand %p92, %p93
      %p95 = pneg %p94
      // Predicated region
      $region9: #{tpu_custom_call.1} parent=5 // pred_check
        _
      $region10: #{tpu_custom_call.1} parent=5 // pred_check_branch
        %97 = sbr.rel (%p94) target = $region12
      $region11: #{tpu_custom_call.1} parent=5 // pred_region
        %s98 = ssub.s32 %s11, 1
        // Predicated region
        $region13: #{tpu_custom_call.1} parent=11 // pred_check
          %p99 = pneg %p58
        $region14: #{tpu_custom_call.1} parent=11 // pred_check_branch
          %101 = sbr.rel (%p99) target = $region16
        $region15: #{tpu_custom_call.1} parent=11 // pred_region
          _
        $region16: #{tpu_custom_call.1} parent=11 // pred_fallthru
          _
      $region12: #{tpu_custom_call.1} parent=5 // pred_fallthru
        _
      %p102 = scmp.lt.s32.totalorder %s11, 2
      // Predicated region
      $region17: #{tpu_custom_call.1} parent=5 // pred_check
        %p103 = pneg %p102
      $region18: #{tpu_custom_call.1} parent=5 // pred_check_branch
        %105 = sbr.rel (%p103) target = $region20
      $region19: #{tpu_custom_call.1} parent=5 // pred_region
        // Predicated region
        $region21: #{tpu_custom_call.1} parent=19 // pred_check
          %p106 = pneg %p31
        $region22: #{tpu_custom_call.1} parent=19 // pred_check_branch
          %108 = sbr.rel (%p106) target = $region24
        $region23: #{tpu_custom_call.1} parent=19 // pred_region
          %s109 = smul.u32 4, %s11
          %s110 = ssub.s32 5, %s109
          %p111 = scmp.lt.s32.totalorder %s110, 4
          %s112 = scalar_select %p111, %s110, 4
          %s113 = smul.u32 8, %s112
          %p114 = scmp.lt.s32.totalorder %s109, 4
          %s115 = scalar_select %p114, %s109, 4
          %s116 = smul.addr %s115, 8
          %s117 = scalar_lea.vmem %s0, %s116
          %s118 = smul.u32 4, %s11
          %s119 = ssub.s32 5, %s118
          %p120 = scmp.lt.s32.totalorder %s119, 4
          %s121 = scalar_select %p120, %s119, 4
          %s122 = smul.u32 8, %s121
        $region24: #{tpu_custom_call.1} parent=19 // pred_fallthru
          _
      $region20: #{tpu_custom_call.1} parent=5 // pred_fallthru
        _
      %p123 = scmp.le.s32.totalorder 1, %s11
      %p124 = scmp.lt.s32.totalorder %s11, 3
      %p125 = pnand %p123, %p124
      %p126 = pneg %p125
      // Predicated region
      $region25: #{tpu_custom_call.1} parent=5 // pred_check
        _
      $region26: #{tpu_custom_call.1} parent=5 // pred_check_branch
        %128 = sbr.rel (%p125) target = $region28
      $region27: #{tpu_custom_call.1} parent=5 // pred_region
        %s129 = ssub.s32 %s11, 1
        %s130 = smul.u32 4, %s16
        %s131 = ssub.s32 5, %s130
        %p132 = scmp.lt.s32.totalorder %s131, 4
        %s133 = scalar_select %p132, %s131, 4
        %s134 = smul.u32 8, %s133
        %p135 = scmp.lt.s32.totalorder %s130, 4
        %s136 = scalar_select %p135, %s130, 4
        %s137 = smul.addr %s136, 8
        %s138 = scalar_lea.vmem %s0, %s137
        %p139 = pneg %p37
        %p140 = pneg %p34
        %p141 = pneg %p58
        %p142 = pneg %p55
        %p143 = pneg %p84
        %p144 = pneg %p81
        %s145 = sand.u32 %s71, 1
        %s146 = scalar_lea.sflag [#allocation3], %s145
        %s147 = sand.u32 %s71, 1
        %s148 = smul.addr %s147, 16
        %s149 = scalar_lea.vmem [#allocation2], %s148
        %s150 = smul.u32 4, %s16
        %s151 = ssub.s32 5, %s150
        %p152 = scmp.lt.s32.totalorder %s151, 4
        %s153 = scalar_select %p152, %s151, 4
        %s154 = smul.u32 8, %s153
        %p155 = scmp.lt.s32.totalorder %s150, 4
        %s156 = scalar_select %p155, %s150, 4
        %s157 = smul.addr %s156, 8
        %s158 = scalar_lea.vmem %s0, %s157
        %s159 = smul.u32 4, %s16
        %s160 = ssub.s32 5, %s159
        %p161 = scmp.lt.s32.totalorder %s160, 4
        %s162 = scalar_select %p161, %s160, 4
        %s163 = smul.u32 8, %s162
        %s164 = smul.u32 4, %s16
        %s165 = ssub.s32 5, %s164
        %p166 = scmp.lt.s32.totalorder %s165, 4
        %s167 = scalar_select %p166, %s165, 4
        %s168 = smul.u32 4, %s167
        %v169 = vld [vmem:[%s158] sm:$0xff]
        %v170 = vld [vmem:[%s158 + $0x8] sm:$0xff]
        %v171 = vld [vmem:[%s158 + $0x10] sm:$0xff]
        %v172 = vld [vmem:[%s158 + $0x18] sm:$0xff]
        %v173 = vld [vmem:[%s1] sm:$0xff]
        %v174 = vld [vmem:[%s1 + $0x8] sm:$0xff]
        %v175 = vld [vmem:[%s1 + $0x10] sm:$0xff]
        %v176 = vld [vmem:[%s1 + $0x18] sm:$0xff]
        %v177 = vld [vmem:[%s1 + $0x20] sm:$0xff]
        %v178 = vld [vmem:[%s1 + $0x28] sm:$0xff]
        %v179 = vld [vmem:[%s1 + $0x30] sm:$0xff]
        %v180 = vld [vmem:[%s1 + $0x38] sm:$0xff]
        %v181 = vld [vmem:[%s1 + $0x40] sm:$0xff]
        %v182 = vld [vmem:[%s1 + $0x48] sm:$0xff]
        %v183 = vld [vmem:[%s1 + $0x50] sm:$0xff]
        %v184 = vld [vmem:[%s1 + $0x58] sm:$0xff]
        %v185 = vld [vmem:[%s1 + $0x60] sm:$0xff]
        %v186 = vld [vmem:[%s1 + $0x68] sm:$0xff]
        %v187 = vld [vmem:[%s1 + $0x70] sm:$0xff]
        %v188 = vld [vmem:[%s1 + $0x78] sm:$0xff]
        %189 = vmatpush.msra.mxu0 %v188
        %190 = vmatpush.msra.mxu0 %v187
        %191 = vmatpush.msra.mxu0 %v186
        %192 = vmatpush.msra.mxu0 %v185
        %193 = vmatpush.msra.mxu0 %v184
        %194 = vmatpush.msra.mxu0 %v183
        %195 = vmatpush.msra.mxu0 %v182
        %196 = vmatpush.msra.mxu0 %v181
        %197 = vmatpush.msra.mxu0 %v180
        %198 = vmatpush.msra.mxu0 %v179
        %199 = vmatpush.msra.mxu0 %v178
        %200 = vmatpush.msra.mxu0 %v177
        %201 = vmatpush.msra.mxu0 %v176
        %202 = vmatpush.msra.mxu0 %v175
        %203 = vmatpush.msra.mxu0 %v174
        %204 = vmatpush.msra.mxu0 %v173
        %205 = vmatmul.f32.gmra.mxu0 %v169
        %v206 = vpop.f32.mrf.mxu0
        %v207 = vadd.f32 0.0, %v206
        %208 = vmatmul.f32.gmra.mxu0 %v170
        %v209 = vpop.f32.mrf.mxu0
        %v210 = vadd.f32 0.0, %v209
        %211 = vmatmul.f32.gmra.mxu0 %v171
        %v212 = vpop.f32.mrf.mxu0
        %v213 = vadd.f32 0.0, %v212
        %214 = vmatmul.f32.gmra.mxu0 %v172
        %v215 = vpop.f32.mrf.mxu0
        %v216 = vadd.f32 0.0, %v215
        %217 = vdwg.mxu0
        %v218 = vpack.c.bf16 %v207, %v207
        %v219 = vpack.c.bf16 %v210, %v210
        %v220 = vpack.c.bf16 %v213, %v213
        %v221 = vpack.c.bf16 %v216, %v216
        %vm222 = vcmask 519168
        %223 = vst.msk [vmem:[%s149] sm:$0xf] %vm222, %v218
        %224 = vst.msk [vmem:[%s149 + $0x4] sm:$0xf] %vm222, %v219
        %225 = vst.msk [vmem:[%s149 + $0x8] sm:$0xf] %vm222, %v220
        %226 = vst.msk [vmem:[%s149 + $0xc] sm:$0xf] %vm222, %v221
        %s227 = sand.u32 %s71, 1
        %s228 = scalar_lea.sflag [#allocation3], %s227
        %s229 = sand.u32 %s71, 1
        %s230 = smul.addr %s229, 16
        %s231 = scalar_lea.vmem [#allocation2], %s230
        // Predicated region
        $region29: #{tpu_custom_call.1} parent=27 // pred_check
          %p232 = pneg %p81
        $region30: #{tpu_custom_call.1} parent=27 // pred_check_branch
          %234 = sbr.rel (%p232) target = $region32
        $region31: #{tpu_custom_call.1} parent=27 // pred_region
          %s235 = smul.u32 4, %s16
          %s236 = ssub.s32 5, %s235
          %p237 = scmp.lt.s32.totalorder %s236, 4
          %s238 = scalar_select %p237, %s236, 4
          %s239 = smul.u32 4, %s238
          %s240 = ssub.s32 16, %s239
          %s241 = sshll.u32 %s240, 4
          %242 = vsyncadd %s228, %s241
          %p243 = scmp.ne.s32.totalorder 0, %s239
          %s244 = smul.addr %s235, 4
          %s245 = scalar_lea.hbm %s2, %s244
          %s246 = smul.u32 4, %s238
          %s247 = sshll.u32 %s231, 4
          %s248 = int_to_ptr.vmem [resolvable:$true] %s247
          %s249 = sshll.u32 %s245, 4
          %s250 = int_to_ptr.hbm [resolvable:$true] %s249
          %s251 = sshll.u32 %s246, 4
          %255 = dma.vmem_to_hbm [thread:$0]  (%p243), %s248, %s251, %s250, %s228, 64, 64, 4
        $region32: #{tpu_custom_call.1} parent=27 // pred_fallthru
          _
      $region28: #{tpu_custom_call.1} parent=5 // pred_fallthru
        _
      %p256 = scmp.le.s32.totalorder 2, %s11
      // Predicated region
      $region33: #{tpu_custom_call.1} parent=5 // pred_check
        %p257 = pneg %p256
      $region34: #{tpu_custom_call.1} parent=5 // pred_check_branch
        %259 = sbr.rel (%p257) target = $region36
      $region35: #{tpu_custom_call.1} parent=5 // pred_region
        %s260 = ssub.s32 %s11, 2
        // Predicated region
        $region37: #{tpu_custom_call.1} parent=35 // pred_check
          %p261 = pneg %p87
        $region38: #{tpu_custom_call.1} parent=35 // pred_check_branch
          %263 = sbr.rel (%p261) target = $region40
        $region39: #{tpu_custom_call.1} parent=35 // pred_region
          %s264 = sand.u32 %s72, 1
          %s265 = scalar_lea.sflag [#allocation3], %s264
          %s266 = sand.u32 %s72, 1
          %s267 = smul.addr %s266, 16
          %s268 = scalar_lea.vmem [#allocation2], %s267
          %270 = dma.done %s265, 256
        $region40: #{tpu_custom_call.1} parent=35 // pred_fallthru
          _
      $region36: #{tpu_custom_call.1} parent=5 // pred_fallthru
        _
    $region6: #{tpu_custom_call.1} parent=1 // loop_footer
      %s15 = sadd.s32 1, %s11
    $region7: #{tpu_custom_call.1} parent=1 // loop_footer_branch
      %10 = sbr.rel target = $region3
    $region8: #{tpu_custom_call.1} parent=1 // loop_exit
      _
    %271 = vsyncpa [#allocation3], 1
    %s272 = scalar_lea.sflag [#allocation3], 1
    %273 = vsyncpa %s272, 1

</llo_original>
